<compile_context>
chip_gen: v7x
topology: tpu7x:2x2x1
jax: 0.10.0
libtpu: 0.0.40
codegen_flags: <defaults>
</compile_context>

<pallas_src>
import functools

import jax
import jax.numpy as jnp
from jax.experimental import pallas as pl
from jax.experimental.pallas import tpu as pltpu


def _round_up(n, m):
    return -(-n // m) * m


def _qnet_kernel(x_ref, p_ref, o_ref, *, in_size, P, r_w1, r_w2, r_w3, r_b):
    """One batch tile of the 3-layer MLP.

    x_ref: (TB, in_size) f32
    p_ref: (n_rows, P)   f32 packed param slab
        rows [r_w1, r_w1+in_size) : W1^T padded  (in_size, P)
        rows [r_w2, r_w2+P)       : W2^T padded  (P, P)
        rows [r_w3, r_w3+P)       : W3^T padded  (P, P)
        rows [r_b,  r_b+8)        : rows 0/1/2 = b1/b2/b3 (lane-padded)
    o_ref: (TB, P) f32 lane-dense padded output
    """
    x = x_ref[...]                                   # (TB, in_size), already f32

    w1 = p_ref[r_w1:r_w1 + in_size, :]               # (in_size, P)
    w2 = p_ref[r_w2:r_w2 + P, :]                     # (P, P)
    w3 = p_ref[r_w3:r_w3 + P, :]                     # (P, P)
    bb = p_ref[r_b:r_b + 8, :]                       # (8, P) bias block
    b1 = bb[0:1, :]
    b2 = bb[1:2, :]
    b3 = bb[2:3, :]

    # ---- layer 1: linear + leaky_relu(0.01) ----
    h1 = jnp.dot(x, w1, preferred_element_type=jnp.float32) + b1
    h1 = jnp.where(h1 > 0, h1, 0.01 * h1)

    # ---- layer 2: linear + leaky_relu(0.01) ----
    h2 = jnp.dot(h1, w2, preferred_element_type=jnp.float32) + b2
    h2 = jnp.where(h2 > 0, h2, 0.01 * h2)

    # ---- layer 3: linear (no activation) ----
    out = jnp.dot(h2, w3, preferred_element_type=jnp.float32) + b3

    o_ref[...] = out.astype(o_ref.dtype)


def pack_params(params):
    """One-time packing of PyTorch-layout params into a single padded f32 slab.

    Weights come in PyTorch layout (out_features, in_features); they are
    transposed to (in, out) ONCE here, zero-padded, and concatenated into one
    (n_rows, P) slab so the kernel needs a single parameter DMA.
    """
    w1, b1 = params["w1"], params["b1"]   # (h1, in),  (h1,)
    w2, b2 = params["w2"], params["b2"]   # (h2, h1),  (h2,)
    w3, b3 = params["w3"], params["b3"]   # (out, h2), (out,)

    in_size = w1.shape[1]
    h1 = w1.shape[0]
    h2 = w2.shape[0]
    out_size = w3.shape[0]

    P = _round_up(max(h1, h2, out_size), 128)   # lane-dense padded width

    r_w1 = 0
    r_w2 = _round_up(in_size, 8)
    r_w3 = r_w2 + P
    r_b = r_w3 + P
    n_rows = r_b + 8

    slab = jnp.zeros((n_rows, P), jnp.float32)
    slab = slab.at[r_w1:r_w1 + in_size, :h1].set(w1.T.astype(jnp.float32))
    slab = slab.at[r_w2:r_w2 + h1, :h2].set(w2.T.astype(jnp.float32))
    slab = slab.at[r_w3:r_w3 + h2, :out_size].set(w3.T.astype(jnp.float32))
    slab = slab.at[r_b + 0, :h1].set(b1.astype(jnp.float32))
    slab = slab.at[r_b + 1, :h2].set(b2.astype(jnp.float32))
    slab = slab.at[r_b + 2, :out_size].set(b3.astype(jnp.float32))

    meta = dict(in_size=in_size, hid1=h1, hid2=h2, out_size=out_size,
                P=P, r_w1=r_w1, r_w2=r_w2, r_w3=r_w3, r_b=r_b)
    return slab, meta


def make_qnet_forward(meta):
    """Returns a jitted forward fn: (x:(B,in) f32, slab) -> (B, out_size)."""
    in_size = meta["in_size"]
    out_size = meta["out_size"]
    P = meta["P"]
    kernel = functools.partial(
        _qnet_kernel,
        in_size=in_size, P=P,
        r_w1=meta["r_w1"], r_w2=meta["r_w2"],
        r_w3=meta["r_w3"], r_b=meta["r_b"],
    )

    def forward(x, slab):
        B = x.shape[0]
        # Batch tiling: single block for small batches; 512-row tiles for big
        # (divisible) batches so the "parallel" axis can use both TCs on v7x.
        TB = 512 if (B % 512 == 0) else B
        grid = (B // TB,)

        out_padded = pl.pallas_call(
            kernel,
            out_shape=jax.ShapeDtypeStruct((B, P), x.dtype),
            grid=grid,
            in_specs=[
                pl.BlockSpec((TB, in_size), lambda i: (i, 0)),
                pl.BlockSpec(slab.shape, lambda i: (0, 0)),   # whole slab, resident
            ],
            out_specs=pl.BlockSpec((TB, P), lambda i: (i, 0)),
            compiler_params=pltpu.CompilerParams(
                dimension_semantics=("parallel",)),
        )(x, slab)

        # Lane-dense kernel output; trim padding lanes here.
        return out_padded[:, :out_size]

    # TODO(synk): for very large-batch training on v6e, store the slab in bf16
    # (keep f32 accumulation in-kernel) to halve HBM traffic.
    return jax.jit(forward)


def init_params(key, input_size, hidden_size, hidden_size2, output_size):
    """Deterministic init mimicking PyTorch nn.Linear default:
    U(-1/sqrt(fan_in), 1/sqrt(fan_in)) for both weight and bias."""
    keys = jax.random.split(key, 6)

    def layer(kw, kb, fan_in, fan_out):
        bound = 1.0 / jnp.sqrt(jnp.float32(fan_in))
        w = jax.random.uniform(kw, (fan_out, fan_in), jnp.float32, -bound, bound)
        b = jax.random.uniform(kb, (fan_out,), jnp.float32, -bound, bound)
        return w, b

    w1, b1 = layer(keys[0], keys[1], input_size, hidden_size)
    w2, b2 = layer(keys[2], keys[3], hidden_size, hidden_size2)
    w3, b3 = layer(keys[4], keys[5], hidden_size2, output_size)
    return {"w1": w1, "b1": b1, "w2": w2, "b2": b2, "w3": w3, "b3": b3}


def _reference_forward(x, params):
    """Pure-JAX reference (matches PyTorch forward semantics)."""
    def leaky(v):
        return jnp.where(v > 0, v, 0.01 * v)
    h = leaky(x @ params["w1"].T + params["b1"])
    h = leaky(h @ params["w2"].T + params["b2"])
    return h @ params["w3"].T + params["b3"]


if __name__ == "__main__":
    # Shapes consistent with the module: Linear_QNet(16, 32, 32, 4)
    input_size, hidden_size, hidden_size2, output_size = 16, 32, 32, 4
    batch = 2

    key = jax.random.PRNGKey(0)
    k_params, k_x = jax.random.split(key)

    params = init_params(k_params, input_size, hidden_size, hidden_size2,
                         output_size)
    x = jax.random.normal(k_x, (batch, input_size), jnp.float32)

    # One-time param packing (transpose + pad + concat), then reusable forward.
    slab, meta = pack_params(params)
    forward = make_qnet_forward(meta)

    out = jax.block_until_ready(forward(x, slab))

    ref = _reference_forward(x, params)
    assert out.shape == (batch, output_size)
    assert jnp.allclose(out, ref, atol=1e-5, rtol=1e-5), "mismatch vs reference"

    print("KERNEL_OK")
</pallas_src>

<mosaic_0001>
module attributes {stable_mosaic.version = 11 : i64} {
  func.func @_qnet_kernel(%arg0: i32, %arg1: memref<2x16xf32, #tpu.memory_space<vmem>>, %arg2: memref<280x128xf32, #tpu.memory_space<vmem>>, %arg3: memref<2x128xf32, #tpu.memory_space<vmem>>) attributes {dimension_semantics = [#tpu.dimension_semantics<parallel>], iteration_bounds = array<i64: 1>, scalar_prefetch = 0 : i64, scratch_operands = 0 : i64, tpu.core_type = #tpu.core_type<tc>, window_params = [{transform_indices = @transform_0, window_bounds = array<i64: 2, 16>}, {pipeline_mode = #tpu.pipeline_mode<synchronous>, transform_indices = @transform_1, window_bounds = array<i64: 280, 128>}, {transform_indices = @transform_2, window_bounds = array<i64: 2, 128>}]} {
    %c0 = arith.constant 0 : index
    %c0_0 = arith.constant 0 : index
    %0 = vector.load %arg1[%c0, %c0_0] : memref<2x16xf32, #tpu.memory_space<vmem>>, vector<2x16xf32>
    %c0_1 = arith.constant 0 : index
    %c0_2 = arith.constant 0 : index
    %1 = vector.load %arg2[%c0_1, %c0_2] : memref<280x128xf32, #tpu.memory_space<vmem>>, vector<16x128xf32>
    %c16 = arith.constant 16 : index
    %c0_3 = arith.constant 0 : index
    %2 = vector.load %arg2[%c16, %c0_3] : memref<280x128xf32, #tpu.memory_space<vmem>>, vector<128x128xf32>
    %c144 = arith.constant 144 : index
    %c0_4 = arith.constant 0 : index
    %3 = vector.load %arg2[%c144, %c0_4] : memref<280x128xf32, #tpu.memory_space<vmem>>, vector<128x128xf32>
    %c272 = arith.constant 272 : index
    %c0_5 = arith.constant 0 : index
    %4 = vector.load %arg2[%c272, %c0_5] : memref<280x128xf32, #tpu.memory_space<vmem>>, vector<8x128xf32>
    %5 = vector.extract_strided_slice %4 {offsets = [0, 0], sizes = [1, 128], strides = [1, 1]} : vector<8x128xf32> to vector<1x128xf32>
    %6 = vector.extract_strided_slice %4 {offsets = [1, 0], sizes = [1, 128], strides = [1, 1]} : vector<8x128xf32> to vector<1x128xf32>
    %7 = vector.extract_strided_slice %4 {offsets = [2, 0], sizes = [1, 128], strides = [1, 1]} : vector<8x128xf32> to vector<1x128xf32>
    %cst = arith.constant dense<0.000000e+00> : vector<2x128xf32>
    %8 = tpu.matmul %0, %1, %cst {dimension_numbers = #tpu.dot_dimension_numbers<[1], [0], [0], [1], [0, 0, 1, 1], [], []>} : vector<2x16xf32>, vector<16x128xf32>, vector<2x128xf32> -> vector<2x128xf32>
    %9 = vector.broadcast %5 : vector<1x128xf32> to vector<2x128xf32>
    %10 = arith.addf %8, %9 : vector<2x128xf32>
    %cst_6 = arith.constant 0.000000e+00 : f32
    %11 = vector.broadcast %cst_6 : f32 to vector<2x128xf32>
    %12 = arith.cmpf ogt, %10, %11 : vector<2x128xf32>
    %cst_7 = arith.constant 0.00999999977 : f32
    %13 = vector.broadcast %cst_7 : f32 to vector<2x128xf32>
    %14 = arith.mulf %13, %10 : vector<2x128xf32>
    %15 = arith.select %12, %10, %14 : vector<2x128xi1>, vector<2x128xf32>
    %cst_8 = arith.constant dense<0.000000e+00> : vector<2x128xf32>
    %16 = tpu.matmul %15, %2, %cst_8 {dimension_numbers = #tpu.dot_dimension_numbers<[1], [0], [0], [1], [0, 0, 1, 1], [], []>} : vector<2x128xf32>, vector<128x128xf32>, vector<2x128xf32> -> vector<2x128xf32>
    %17 = vector.broadcast %6 : vector<1x128xf32> to vector<2x128xf32>
    %18 = arith.addf %16, %17 : vector<2x128xf32>
    %cst_9 = arith.constant 0.000000e+00 : f32
    %19 = vector.broadcast %cst_9 : f32 to vector<2x128xf32>
    %20 = arith.cmpf ogt, %18, %19 : vector<2x128xf32>
    %cst_10 = arith.constant 0.00999999977 : f32
    %21 = vector.broadcast %cst_10 : f32 to vector<2x128xf32>
    %22 = arith.mulf %21, %18 : vector<2x128xf32>
    %23 = arith.select %20, %18, %22 : vector<2x128xi1>, vector<2x128xf32>
    %cst_11 = arith.constant dense<0.000000e+00> : vector<2x128xf32>
    %24 = tpu.matmul %23, %3, %cst_11 {dimension_numbers = #tpu.dot_dimension_numbers<[1], [0], [0], [1], [0, 0, 1, 1], [], []>} : vector<2x128xf32>, vector<128x128xf32>, vector<2x128xf32> -> vector<2x128xf32>
    %25 = vector.broadcast %7 : vector<1x128xf32> to vector<2x128xf32>
    %26 = arith.addf %24, %25 : vector<2x128xf32>
    %c0_12 = arith.constant 0 : index
    %c0_13 = arith.constant 0 : index
    %27 = vector.load %arg3[%c0_12, %c0_13] : memref<2x128xf32, #tpu.memory_space<vmem>>, vector<2x128xf32>
    tpu.vector_store %arg3[%c0_12, %c0_13], %26 {strides = array<i32>} : memref<2x128xf32, #tpu.memory_space<vmem>>, vector<2x128xf32>,
    return
  }
  func.func @transform_0(%arg0: i32) -> (i32, i32) {
    %c0_i32 = arith.constant 0 : i32
    %c0_i32_0 = arith.constant 0 : i32
    return %arg0, %c0_i32 : i32, i32
  }
  func.func @transform_1(%arg0: i32) -> (i32, i32) {
    %c0_i32 = arith.constant 0 : i32
    %c0_i32_0 = arith.constant 0 : i32
    %c0_i32_1 = arith.constant 0 : i32
    return %c0_i32, %c0_i32_0 : i32, i32
  }
  func.func @transform_2(%arg0: i32) -> (i32, i32) {
    %c0_i32 = arith.constant 0 : i32
    %c0_i32_0 = arith.constant 0 : i32
    return %arg0, %c0_i32 : i32, i32
  }
}

</mosaic_0001>

<llo_original>
// kernel: forward.1
$region0: #{forward.1}
  #allocation0 [shape = 'u32[]', space=smem, size = 0x4, offset = 0x4, fixed_abs, tag = 'smem constant byte address 0x4 - core index']
  #allocation1 [shape = 'u32[144,128]{1,0:T(1,128)}', space=vmem, size = 0x12000, scoped, tag = 'internal scratch']
  %s0 = inlined_call_operand.hbm [shape: f32[2,16], index: 0, kind: input, shape index: {}]
  %s1 = inlined_call_operand.hbm [shape: f32[280,128], index: 1, kind: input, shape index: {}]
  %s2 = inlined_call_operand.hbm [shape: f32[2,128], index: 2, kind: output, shape index: {}]
  %s3 = sld [smem:[#allocation0]]
  $region26: #{forward.1} parent=0
    _
  %s5 = ssub.s32 1, %s3
  %s6 = scalar_select 0, %s5, %s3
  $region1: #{forward.1} parent=0
    #allocation2 [shape = 'u8[1024]{0}', space=vmem, size = 0x400, scoped, tag = 'input window, operand 0, single buffered']
    #allocation3 [shape = 's32[1]{0}', space=sflag, size = 0x4, scoped, tag = 'scoped memory for forward.1']
    #allocation4 [shape = 's32[1]{0}', space=sflag, size = 0x4, scoped, tag = 'scoped memory for forward.1']
    #allocation5 [shape = 'u8[143360]{0}', space=vmem, size = 0x23000, scoped, tag = 'input window, operand 1, single buffered']
    #allocation6 [shape = 's32[1]{0}', space=sflag, size = 0x4, scoped, tag = 'scoped memory for forward.1']
    #allocation7 [shape = 'u8[1024]{0}', space=vmem, size = 0x400, scoped, tag = 'output window, operand 0, single buffered']
    %7 = vsyncpa [#allocation3], 0
    %8 = vsyncpa [#allocation6], 0
    %9 = vsyncpa [#allocation4], 0
    // Predicated region
    $region2: #{forward.1} parent=1 // pred_check
      _
    $region3: #{forward.1} parent=1 // pred_check_branch
      %11 = sbr.rel (0) target = $region5
    $region4: #{forward.1} parent=1 // pred_region
      %s13 = ssub.s32 32, 32
      %14 = vsyncadd [#allocation3], %s13
      %s16 = sshll.u32 [#allocation2], 4
      %s17 = int_to_ptr.vmem [resolvable:$true] %s16
      %19 = dma.hbm_to_vmem [thread:$0]  %s0, 32, %s17, [#allocation3]
    $region5: #{forward.1} parent=1 // pred_fallthru
      _
    // Predicated region
    $region6: #{forward.1} parent=1 // pred_check
      _
    $region7: #{forward.1} parent=1 // pred_check_branch
      %21 = sbr.rel (0) target = $region9
    $region8: #{forward.1} parent=1 // pred_region
      %s23 = ssub.s32 4480, 4480
      %24 = vsyncadd [#allocation6], %s23
      %s25 = sshll.u32 [#allocation5], 4
      %s26 = int_to_ptr.vmem [resolvable:$true] %s25
      %31 = dma.hbm_to_vmem [thread:$0]  %s1, 4480, %s26, [#allocation6], 128, 128, 8
    $region9: #{forward.1} parent=1 // pred_fallthru
      _
    // Predicated region
    $region10: #{forward.1} parent=1 // pred_check
      _
    $region11: #{forward.1} parent=1 // pred_check_branch
      %33 = sbr.rel (0) target = $region13
    $region12: #{forward.1} parent=1 // pred_region
      %34 = dma.done [#allocation3], 32
    $region13: #{forward.1} parent=1 // pred_fallthru
      _
    // Predicated region
    $region14: #{forward.1} parent=1 // pred_check
      _
    $region15: #{forward.1} parent=1 // pred_check_branch
      %36 = sbr.rel (0) target = $region17
    $region16: #{forward.1} parent=1 // pred_region
      %37 = dma.done [#allocation6], 4480
    $region17: #{forward.1} parent=1 // pred_fallthru
      _
    %v38 = vld [vmem:[#allocation2] sm:$0x3]
    %v39 = vld [vmem:[#allocation5] sm:$0xff]
    %v40 = vld [vmem:[#allocation5 + $0x8] sm:$0xff]
    %v41 = vld [vmem:[#allocation5 + $0x10] sm:$0xff]
    %v42 = vld [vmem:[#allocation5 + $0x18] sm:$0xff]
    %v43 = vld [vmem:[#allocation5 + $0x20] sm:$0xff]
    %v44 = vld [vmem:[#allocation5 + $0x28] sm:$0xff]
    %v45 = vld [vmem:[#allocation5 + $0x30] sm:$0xff]
    %v46 = vld [vmem:[#allocation5 + $0x38] sm:$0xff]
    %v47 = vld [vmem:[#allocation5 + $0x40] sm:$0xff]
    %v48 = vld [vmem:[#allocation5 + $0x48] sm:$0xff]
    %v49 = vld [vmem:[#allocation5 + $0x50] sm:$0xff]
    %v50 = vld [vmem:[#allocation5 + $0x58] sm:$0xff]
    %v51 = vld [vmem:[#allocation5 + $0x60] sm:$0xff]
    %v52 = vld [vmem:[#allocation5 + $0x68] sm:$0xff]
    %v53 = vld [vmem:[#allocation5 + $0x70] sm:$0xff]
    %v54 = vld [vmem:[#allocation5 + $0x78] sm:$0xff]
    %v55 = vld [vmem:[#allocation5 + $0x80] sm:$0xff]
    %v56 = vld [vmem:[#allocation5 + $0x88] sm:$0xff]
    %v57 = vld [vmem:[#allocation5 + $0x90] sm:$0xff]
    %v58 = vld [vmem:[#allocation5 + $0x98] sm:$0xff]
    %v59 = vld [vmem:[#allocation5 + $0xa0] sm:$0xff]
    %v60 = vld [vmem:[#allocation5 + $0xa8] sm:$0xff]
    %v61 = vld [vmem:[#allocation5 + $0xb0] sm:$0xff]
    %v62 = vld [vmem:[#allocation5 + $0xb8] sm:$0xff]
    %v63 = vld [vmem:[#allocation5 + $0xc0] sm:$0xff]
    %v64 = vld [vmem:[#allocation5 + $0xc8] sm:$0xff]
    %v65 = vld [vmem:[#allocation5 + $0xd0] sm:$0xff]
    %v66 = vld [vmem:[#allocation5 + $0xd8] sm:$0xff]
    %v67 = vld [vmem:[#allocation5 + $0xe0] sm:$0xff]
    %v68 = vld [vmem:[#allocation5 + $0xe8] sm:$0xff]
    %v69 = vld [vmem:[#allocation5 + $0xf0] sm:$0xff]
    %v70 = vld [vmem:[#allocation5 + $0xf8] sm:$0xff]
    %v71 = vld [vmem:[#allocation5 + $0x100] sm:$0xff]
    %v72 = vld [vmem:[#allocation5 + $0x108] sm:$0xff]
    %v73 = vld [vmem:[#allocation5 + $0x110] sm:$0xff]
    %v74 = vlaneseq
    %v75 = vshrl.u32 %v74, 7
    %v76 = vsub.s32 0, %v75
    %v77 = vrot.slane %v73, %v76
    %vm78 = vcmask 130048
    %v80 = vsel %vm78, %v38, 0
    %82 = vmatprep.subr.mxu0 0.0
    %83 = vmatpush1.msra.mxu0 %v39
    %84 = vmatprep.subr.mxu0 0.0
    %85 = vmatpush1.msra.mxu0 %v40
    %86 = vmatprep.subr.mxu0 0.0
    %87 = vmatpush1.msra.mxu0 0.0
    %88 = vmatprep.subr.mxu0 0.0
    %89 = vmatpush1.msra.mxu0 0.0
    %90 = vmatprep.subr.mxu0 0.0
    %91 = vmatpush1.msra.mxu0 0.0
    %92 = vmatprep.subr.mxu0 0.0
    %93 = vmatpush1.msra.mxu0 0.0
    %94 = vmatprep.subr.mxu0 0.0
    %95 = vmatpush1.msra.mxu0 0.0
    %96 = vmatprep.subr.mxu0 0.0
    %97 = vmatpush1.msra.mxu0 0.0
    %98 = vmatprep.subr.mxu0 0.0
    %99 = vmatpush1.msra.mxu0 0.0
    %100 = vmatprep.subr.mxu0 0.0
    %101 = vmatpush1.msra.mxu0 0.0
    %102 = vmatprep.subr.mxu0 0.0
    %103 = vmatpush1.msra.mxu0 0.0
    %104 = vmatprep.subr.mxu0 0.0
    %105 = vmatpush1.msra.mxu0 0.0
    %106 = vmatprep.subr.mxu0 0.0
    %107 = vmatpush1.msra.mxu0 0.0
    %108 = vmatprep.subr.mxu0 0.0
    %109 = vmatpush1.msra.mxu0 0.0
    %110 = vmatprep.subr.mxu0 0.0
    %111 = vmatpush1.msra.mxu0 0.0
    %112 = vmatprep.subr.mxu0 0.0
    %113 = vmatpush1.msra.mxu0 0.0
    %114 = vmatprep.subr.mxu0 0.0
    %115 = vmatpush1.msra.mxu0 0.0
    %116 = vmatprep.subr.mxu0 0.0
    %117 = vmatpush1.msra.mxu0 0.0
    %118 = vmatprep.subr.mxu0 0.0
    %119 = vmatpush1.msra.mxu0 0.0
    %120 = vmatprep.subr.mxu0 0.0
    %121 = vmatpush1.msra.mxu0 0.0
    %122 = vmatprep.subr.mxu0 0.0
    %123 = vmatpush1.msra.mxu0 0.0
    %124 = vmatprep.subr.mxu0 0.0
    %125 = vmatpush1.msra.mxu0 0.0
    %126 = vmatprep.subr.mxu0 0.0
    %127 = vmatpush1.msra.mxu0 0.0
    %128 = vmatprep.subr.mxu0 0.0
    %129 = vmatpush1.msra.mxu0 0.0
    %130 = vmatprep.subr.mxu0 0.0
    %131 = vmatpush1.msra.mxu0 0.0
    %132 = vmatprep.subr.mxu0 0.0
    %133 = vmatpush1.msra.mxu0 0.0
    %134 = vmatprep.subr.mxu0 0.0
    %135 = vmatpush1.msra.mxu0 0.0
    %136 = vmatprep.subr.mxu0 0.0
    %137 = vmatpush1.msra.mxu0 0.0
    %138 = vmatprep.subr.mxu0 0.0
    %139 = vmatpush1.msra.mxu0 0.0
    %140 = vmatprep.subr.mxu0 0.0
    %141 = vmatpush1.msra.mxu0 0.0
    %142 = vmatprep.subr.mxu0 0.0
    %143 = vmatpush1.msra.mxu0 0.0
    %144 = vmatprep.subr.mxu0 0.0
    %145 = vmatpush1.msra.mxu0 0.0
    %146 = vmatprep.mubr.f32.mxu0 0.0
    %147 = vmatmul.mubr.f32.gmra.mrb[0].mxu0 %v80
    %v148 = vpop.f32.mrb[0].mxu0
    %v149 = vadd.f32 %v77, %v148
    %v150 = vpop.f32.mrb[0].mxu0
    %151 = vdwg.mxu0
    %vm152 = vcmp.gt.f32.partialorder %v149, 0.0
    %v153 = vmul.f32 %v149, 0.01
    %v154 = vsel %vm152, %v149, %v153
    %v155 = vlaneseq
    %v156 = vshrl.u32 %v155, 7
    %v157 = vsub.s32 1, %v156
    %v158 = vrot.slane %v73, %v157
    %159 = vmatprep.subr.mxu0 0.0
    %160 = vmatpush1.msra.mxu0 %v41
    %161 = vmatprep.subr.mxu0 0.0
    %162 = vmatpush1.msra.mxu0 %v42
    %163 = vmatprep.subr.mxu0 0.0
    %164 = vmatpush1.msra.mxu0 %v43
    %165 = vmatprep.subr.mxu0 0.0
    %166 = vmatpush1.msra.mxu0 %v44
    %167 = vmatprep.subr.mxu0 0.0
    %168 = vmatpush1.msra.mxu0 %v45
    %169 = vmatprep.subr.mxu0 0.0
    %170 = vmatpush1.msra.mxu0 %v46
    %171 = vmatprep.subr.mxu0 0.0
    %172 = vmatpush1.msra.mxu0 %v47
    %173 = vmatprep.subr.mxu0 0.0
    %174 = vmatpush1.msra.mxu0 %v48
    %175 = vmatprep.subr.mxu0 0.0
    %176 = vmatpush1.msra.mxu0 %v49
    %177 = vmatprep.subr.mxu0 0.0
    %178 = vmatpush1.msra.mxu0 %v50
    %179 = vmatprep.subr.mxu0 0.0
    %180 = vmatpush1.msra.mxu0 %v51
    %181 = vmatprep.subr.mxu0 0.0
    %182 = vmatpush1.msra.mxu0 %v52
    %183 = vmatprep.subr.mxu0 0.0
    %184 = vmatpush1.msra.mxu0 %v53
    %185 = vmatprep.subr.mxu0 0.0
    %186 = vmatpush1.msra.mxu0 %v54
    %187 = vmatprep.subr.mxu0 0.0
    %188 = vmatpush1.msra.mxu0 %v55
    %189 = vmatprep.subr.mxu0 0.0
    %190 = vmatpush1.msra.mxu0 %v56
    %191 = vmatprep.subr.mxu0 0.0
    %192 = vmatpush1.msra.mxu0 0.0
    %193 = vmatprep.subr.mxu0 0.0
    %194 = vmatpush1.msra.mxu0 0.0
    %195 = vmatprep.subr.mxu0 0.0
    %196 = vmatpush1.msra.mxu0 0.0
    %197 = vmatprep.subr.mxu0 0.0
    %198 = vmatpush1.msra.mxu0 0.0
    %199 = vmatprep.subr.mxu0 0.0
    %200 = vmatpush1.msra.mxu0 0.0
    %201 = vmatprep.subr.mxu0 0.0
    %202 = vmatpush1.msra.mxu0 0.0
    %203 = vmatprep.subr.mxu0 0.0
    %204 = vmatpush1.msra.mxu0 0.0
    %205 = vmatprep.subr.mxu0 0.0
    %206 = vmatpush1.msra.mxu0 0.0
    %207 = vmatprep.subr.mxu0 0.0
    %208 = vmatpush1.msra.mxu0 0.0
    %209 = vmatprep.subr.mxu0 0.0
    %210 = vmatpush1.msra.mxu0 0.0
    %211 = vmatprep.subr.mxu0 0.0
    %212 = vmatpush1.msra.mxu0 0.0
    %213 = vmatprep.subr.mxu0 0.0
    %214 = vmatpush1.msra.mxu0 0.0
    %215 = vmatprep.subr.mxu0 0.0
    %216 = vmatpush1.msra.mxu0 0.0
    %217 = vmatprep.subr.mxu0 0.0
    %218 = vmatpush1.msra.mxu0 0.0
    %219 = vmatprep.subr.mxu0 0.0
    %220 = vmatpush1.msra.mxu0 0.0
    %221 = vmatprep.subr.mxu0 0.0
    %222 = vmatpush1.msra.mxu0 0.0
    %223 = vmatprep.mubr.f32.mxu0 0.0
    %224 = vmatmul.mubr.f32.gmra.mrb[0].mxu0 %v154
    %v225 = vpop.f32.mrb[0].mxu0
    %v226 = vadd.f32 %v158, %v225
    %v227 = vpop.f32.mrb[0].mxu0
    %228 = vdwg.mxu0
    %vm229 = vcmp.gt.f32.partialorder %v226, 0.0
    %v230 = vmul.f32 %v226, 0.01
    %v231 = vsel %vm229, %v226, %v230
    %v232 = vlaneseq
    %v233 = vshrl.u32 %v232, 7
    %v234 = vsub.s32 2, %v233
    %v235 = vrot.slane %v73, %v234
    %236 = vmatprep.subr.mxu0 0.0
    %237 = vmatpush1.msra.mxu0 %v57
    %238 = vmatprep.subr.mxu0 0.0
    %239 = vmatpush1.msra.mxu0 %v58
    %240 = vmatprep.subr.mxu0 0.0
    %241 = vmatpush1.msra.mxu0 %v59
    %242 = vmatprep.subr.mxu0 0.0
    %243 = vmatpush1.msra.mxu0 %v60
    %244 = vmatprep.subr.mxu0 0.0
    %245 = vmatpush1.msra.mxu0 %v61
    %246 = vmatprep.subr.mxu0 0.0
    %247 = vmatpush1.msra.mxu0 %v62
    %248 = vmatprep.subr.mxu0 0.0
    %249 = vmatpush1.msra.mxu0 %v63
    %250 = vmatprep.subr.mxu0 0.0
    %251 = vmatpush1.msra.mxu0 %v64
    %252 = vmatprep.subr.mxu0 0.0
    %253 = vmatpush1.msra.mxu0 %v65
    %254 = vmatprep.subr.mxu0 0.0
    %255 = vmatpush1.msra.mxu0 %v66
    %256 = vmatprep.subr.mxu0 0.0
    %257 = vmatpush1.msra.mxu0 %v67
    %258 = vmatprep.subr.mxu0 0.0
    %259 = vmatpush1.msra.mxu0 %v68
    %260 = vmatprep.subr.mxu0 0.0
    %261 = vmatpush1.msra.mxu0 %v69
    %262 = vmatprep.subr.mxu0 0.0
    %263 = vmatpush1.msra.mxu0 %v70
    %264 = vmatprep.subr.mxu0 0.0
    %265 = vmatpush1.msra.mxu0 %v71
    %266 = vmatprep.subr.mxu0 0.0
    %267 = vmatpush1.msra.mxu0 %v72
    %268 = vmatprep.subr.mxu0 0.0
    %269 = vmatpush1.msra.mxu0 0.0
    %270 = vmatprep.subr.mxu0 0.0
    %271 = vmatpush1.msra.mxu0 0.0
    %272 = vmatprep.subr.mxu0 0.0
    %273 = vmatpush1.msra.mxu0 0.0
    %274 = vmatprep.subr.mxu0 0.0
    %275 = vmatpush1.msra.mxu0 0.0
    %276 = vmatprep.subr.mxu0 0.0
    %277 = vmatpush1.msra.mxu0 0.0
    %278 = vmatprep.subr.mxu0 0.0
    %279 = vmatpush1.msra.mxu0 0.0
    %280 = vmatprep.subr.mxu0 0.0
    %281 = vmatpush1.msra.mxu0 0.0
    %282 = vmatprep.subr.mxu0 0.0
    %283 = vmatpush1.msra.mxu0 0.0
    %284 = vmatprep.subr.mxu0 0.0
    %285 = vmatpush1.msra.mxu0 0.0
    %286 = vmatprep.subr.mxu0 0.0
    %287 = vmatpush1.msra.mxu0 0.0
    %288 = vmatprep.subr.mxu0 0.0
    %289 = vmatpush1.msra.mxu0 0.0
    %290 = vmatprep.subr.mxu0 0.0
    %291 = vmatpush1.msra.mxu0 0.0
    %292 = vmatprep.subr.mxu0 0.0
    %293 = vmatpush1.msra.mxu0 0.0
    %294 = vmatprep.subr.mxu0 0.0
    %295 = vmatpush1.msra.mxu0 0.0
    %296 = vmatprep.subr.mxu0 0.0
    %297 = vmatpush1.msra.mxu0 0.0
    %298 = vmatprep.subr.mxu0 0.0
    %299 = vmatpush1.msra.mxu0 0.0
    %300 = vmatprep.mubr.f32.mxu0 0.0
    %301 = vmatmul.mubr.f32.gmra.mrb[0].mxu0 %v231
    %v302 = vpop.f32.mrb[0].mxu0
    %v303 = vadd.f32 %v235, %v302
    %v304 = vpop.f32.mrb[0].mxu0
    %305 = vdwg.mxu0
    %306 = vst [vmem:[#allocation7] sm:$0x3] %v303
    // Predicated region
    $region18: #{forward.1} parent=1 // pred_check
      _
    $region19: #{forward.1} parent=1 // pred_check_branch
      %308 = sbr.rel (0) target = $region21
    $region20: #{forward.1} parent=1 // pred_region
      %s310 = ssub.s32 32, 32
      %311 = vsyncadd [#allocation4], %s310
      %s313 = sshll.u32 [#allocation7], 4
      %s314 = int_to_ptr.vmem [resolvable:$true] %s313
      %316 = dma.vmem_to_hbm [thread:$0]  %s314, 32, %s2, [#allocation4]
    $region21: #{forward.1} parent=1 // pred_fallthru
      _
    // Predicated region
    $region22: #{forward.1} parent=1 // pred_check
      _
    $region23: #{forward.1} parent=1 // pred_check_branch
      %318 = sbr.rel (0) target = $region25
    $region24: #{forward.1} parent=1 // pred_region
      %319 = dma.done [#allocation4], 32
    $region25: #{forward.1} parent=1 // pred_fallthru
      _
    %320 = vsyncpa [#allocation3], 1
    %321 = vsyncpa [#allocation6], 1
    %322 = vsyncpa [#allocation4], 1

</llo_original>
